<compile_context>
chip_gen: v5e
topology: v5e:2x2
jax: 0.10.0
libtpu: 0.0.40
codegen_flags: <defaults>
</compile_context>

<pallas_src>
import functools

import jax
import jax.numpy as jnp
from jax.experimental import pallas as pl
from jax.experimental.pallas import tpu as pltpu

IN_FEATURES = 50
OUT_FEATURES = 5


def _linear_kernel(x_ref, wt_ref, b_ref, o_ref):
    # out_tile = x_tile @ W^T + b, f32 accumulation on the MXU.
    acc = jnp.dot(x_ref[...], wt_ref[...], preferred_element_type=jnp.float32)
    o_ref[...] = (acc + b_ref[...].astype(jnp.float32)).astype(o_ref.dtype)


def prepare_params(weight, bias, compute_dtype=None):
    """One-time parameter prep (hoisted out of the per-call path).

    PyTorch nn.Linear stores weight as (out, in) = (5, 50); the kernel wants
    (in, out) = (50, 5). Bias becomes (1, 5) so it broadcasts over the batch
    tile, kept in f32 for the f32 accumulator add.
    """
    wt = weight.T
    if compute_dtype is not None:
        wt = wt.astype(compute_dtype)
    b2 = bias.reshape(1, OUT_FEATURES).astype(jnp.float32)
    return wt, b2


@functools.partial(jax.jit, static_argnames=("tm", "compute_dtype"))
def fnnsplit6_forward(x, wt, b2, *, tm=None, compute_dtype=None):
    """Forward pass of FNNspilt6: y = x @ W^T + b.

    x:  (B, 50)
    wt: (50, 5)   -- pre-transposed weight from prepare_params
    b2: (1, 5)    -- pre-reshaped bias from prepare_params
    returns (B, 5) in x's original dtype.
    """
    B, in_f = x.shape
    in_f_w, out_f = wt.shape
    assert in_f == IN_FEATURES and in_f_w == IN_FEATURES and out_f == OUT_FEATURES

    out_dtype = x.dtype
    if compute_dtype is not None:
        # bf16 inputs halve HBM read traffic (this op is memory-bound).
        x = x.astype(compute_dtype)

    if tm is None:
        # Whole batch in one tile when small; otherwise a large multiple-of-8
        # batch tile to amortize the ~0.35us per-grid-step overhead and get
        # double-buffered prefetch, while staying tiny in VMEM (K=50).
        tm = B if B <= 4096 else 4096
    assert tm == B or tm % 8 == 0, "batch tile must be a multiple of 8 (sublane)"

    grid = (pl.cdiv(B, tm),)

    cost = pl.CostEstimate(
        flops=2 * B * in_f * out_f,
        transcendentals=0,
        bytes_accessed=(
            B * in_f * jnp.dtype(x.dtype).itemsize          # x read
            + in_f * out_f * jnp.dtype(wt.dtype).itemsize   # weight read
            + out_f * 4                                     # bias read
            + B * out_f * jnp.dtype(out_dtype).itemsize     # output write
        ),
    )

    return pl.pallas_call(
        _linear_kernel,
        out_shape=jax.ShapeDtypeStruct((B, out_f), out_dtype),
        grid=grid,
        in_specs=[
            pl.BlockSpec((tm, in_f), lambda i: (i, 0)),      # batch-tiled x
            pl.BlockSpec((in_f, out_f), lambda i: (0, 0)),   # weight: VMEM-resident
            pl.BlockSpec((1, out_f), lambda i: (0, 0)),      # bias: VMEM-resident
        ],
        out_specs=pl.BlockSpec((tm, out_f), lambda i: (i, 0)),
        compiler_params=pltpu.CompilerParams(
            # Batch grid axis is embarrassingly parallel -> megacore split on v7x.
            dimension_semantics=("parallel",),
        ),
        cost_estimate=cost,
    )(x, wt, b2)
    # TODO(synk): at tiny B this op is launch/DMA dominated; fuse it with the
    # neighboring FNNsplit pieces / activation into one kernel when integrating.


if __name__ == "__main__":
    key = jax.random.PRNGKey(0)
    k_x, k_w, k_b, k_x2 = jax.random.split(key, 4)

    B, IN, OUT = 8, IN_FEATURES, OUT_FEATURES

    # Deterministic "parameter init" (synthetic; mimics PyTorch uniform range).
    bound = 1.0 / jnp.sqrt(IN)
    weight = jax.random.uniform(k_w, (OUT, IN), jnp.float32, -bound, bound)
    bias = jax.random.uniform(k_b, (OUT,), jnp.float32, -bound, bound)

    # One-time param prep (hoisted transpose/reshape).
    wt, b2 = prepare_params(weight, bias)

    # Small-shape run consistent with the module: x = (8, 50).
    x = jax.random.normal(k_x, (B, IN), jnp.float32)
    out = fnnsplit6_forward(x, wt, b2)
    jax.block_until_ready(out)

    ref = x @ weight.T + bias
    assert out.shape == (B, OUT)
    assert jnp.allclose(out, ref, atol=1e-5, rtol=1e-5)

    # Exercise the multi-step batch grid + parallel axis (4 tiles of 16 rows).
    x2 = jax.random.normal(k_x2, (64, IN), jnp.float32)
    out2 = fnnsplit6_forward(x2, wt, b2, tm=16)
    jax.block_until_ready(out2)
    ref2 = x2 @ weight.T + bias
    assert out2.shape == (64, OUT)
    assert jnp.allclose(out2, ref2, atol=1e-5, rtol=1e-5)

    print("KERNEL_OK")
</pallas_src>

<mosaic_0001>
module attributes {stable_mosaic.version = 11 : i64} {
  func.func @_linear_kernel(%arg0: i32, %arg1: memref<8x50xf32, #tpu.memory_space<vmem>>, %arg2: memref<50x5xf32, #tpu.memory_space<vmem>>, %arg3: memref<1x5xf32, #tpu.memory_space<vmem>>, %arg4: memref<8x5xf32, #tpu.memory_space<vmem>>) attributes {dimension_semantics = [#tpu.dimension_semantics<parallel>], iteration_bounds = array<i64: 1>, scalar_prefetch = 0 : i64, scratch_operands = 0 : i64, tpu.core_type = #tpu.core_type<tc>, window_params = [{transform_indices = @transform_0, window_bounds = array<i64: 8, 50>}, {pipeline_mode = #tpu.pipeline_mode<synchronous>, transform_indices = @transform_1, window_bounds = array<i64: 50, 5>}, {pipeline_mode = #tpu.pipeline_mode<synchronous>, transform_indices = @transform_2, window_bounds = array<i64: 1, 5>}, {transform_indices = @transform_3, window_bounds = array<i64: 8, 5>}]} {
    %c0 = arith.constant 0 : index
    %c0_0 = arith.constant 0 : index
    %0 = vector.load %arg1[%c0, %c0_0] : memref<8x50xf32, #tpu.memory_space<vmem>>, vector<8x50xf32>
    %c0_1 = arith.constant 0 : index
    %c0_2 = arith.constant 0 : index
    %1 = vector.load %arg2[%c0_1, %c0_2] : memref<50x5xf32, #tpu.memory_space<vmem>>, vector<50x5xf32>
    %cst = arith.constant dense<0.000000e+00> : vector<8x5xf32>
    %2 = tpu.matmul %0, %1, %cst {dimension_numbers = #tpu.dot_dimension_numbers<[1], [0], [0], [1], [0, 0, 1, 1], [], []>} : vector<8x50xf32>, vector<50x5xf32>, vector<8x5xf32> -> vector<8x5xf32>
    %c0_3 = arith.constant 0 : index
    %c0_4 = arith.constant 0 : index
    %3 = vector.load %arg3[%c0_3, %c0_4] : memref<1x5xf32, #tpu.memory_space<vmem>>, vector<1x5xf32>
    %4 = vector.broadcast %3 : vector<1x5xf32> to vector<8x5xf32>
    %5 = arith.addf %2, %4 : vector<8x5xf32>
    %c0_5 = arith.constant 0 : index
    %c0_6 = arith.constant 0 : index
    %6 = vector.load %arg4[%c0_5, %c0_6] : memref<8x5xf32, #tpu.memory_space<vmem>>, vector<8x5xf32>
    tpu.vector_store %arg4[%c0_5, %c0_6], %5 {strides = array<i32>} : memref<8x5xf32, #tpu.memory_space<vmem>>, vector<8x5xf32>,
    return
  }
  func.func @transform_0(%arg0: i32) -> (i32, i32) {
    %c0_i32 = arith.constant 0 : i32
    %c0_i32_0 = arith.constant 0 : i32
    return %arg0, %c0_i32 : i32, i32
  }
  func.func @transform_1(%arg0: i32) -> (i32, i32) {
    %c0_i32 = arith.constant 0 : i32
    %c0_i32_0 = arith.constant 0 : i32
    %c0_i32_1 = arith.constant 0 : i32
    return %c0_i32, %c0_i32_0 : i32, i32
  }
  func.func @transform_2(%arg0: i32) -> (i32, i32) {
    %c0_i32 = arith.constant 0 : i32
    %c0_i32_0 = arith.constant 0 : i32
    %c0_i32_1 = arith.constant 0 : i32
    return %c0_i32, %c0_i32_0 : i32, i32
  }
  func.func @transform_3(%arg0: i32) -> (i32, i32) {
    %c0_i32 = arith.constant 0 : i32
    %c0_i32_0 = arith.constant 0 : i32
    return %arg0, %c0_i32 : i32, i32
  }
}

</mosaic_0001>

<llo_original>
// kernel: fnnsplit6_forward.1
$region0: #{fnnsplit6_forward.1}
  #allocation0 [shape = 'u32[]', space=smem, size = 0x4, offset = 0x4, fixed_abs, tag = 'smem constant byte address 0x4 - core index']
  #allocation1 [shape = 'u32[72,128]{1,0:T(1,128)}', space=vmem, size = 0x9000, scoped, tag = 'internal scratch']
  %s0 = inlined_call_operand.vmem [shape: f32[8,50], index: 0, kind: input, shape index: {}]
  %s1 = inlined_call_operand.vmem [shape: f32[50,5], index: 1, kind: input, shape index: {}]
  %s2 = inlined_call_operand.vmem [shape: f32[1,5], index: 2, kind: input, shape index: {}]
  %s3 = inlined_call_operand.hbm [shape: f32[8,5], index: 3, kind: output, shape index: {}]
  %s4 = sld [smem:[#allocation0]]
  $region22: #{fnnsplit6_forward.1} parent=0
    _
  %s6 = ssub.s32 1, %s4
  %s7 = scalar_select 0, %s6, %s4
  $region1: #{fnnsplit6_forward.1} parent=0
    #allocation2 [shape = 'u8[4096]{0}', space=vmem, size = 0x1000, scoped, tag = 'output window, operand 0, single buffered']
    #allocation3 [shape = 's32[1]{0}', space=sflag, size = 0x4, scoped, tag = 'scoped memory for fnnsplit6_forward.1']
    %8 = vsyncpa [#allocation3], 0
    // Predicated region
    $region2: #{fnnsplit6_forward.1} parent=1 // pred_check
      _
    $region3: #{fnnsplit6_forward.1} parent=1 // pred_check_branch
      %10 = sbr.rel (0) target = $region5
    $region4: #{fnnsplit6_forward.1} parent=1 // pred_region
      _
    $region5: #{fnnsplit6_forward.1} parent=1 // pred_fallthru
      _
    // Predicated region
    $region6: #{fnnsplit6_forward.1} parent=1 // pred_check
      _
    $region7: #{fnnsplit6_forward.1} parent=1 // pred_check_branch
      %12 = sbr.rel (0) target = $region9
    $region8: #{fnnsplit6_forward.1} parent=1 // pred_region
      _
    $region9: #{fnnsplit6_forward.1} parent=1 // pred_fallthru
      _
    // Predicated region
    $region10: #{fnnsplit6_forward.1} parent=1 // pred_check
      _
    $region11: #{fnnsplit6_forward.1} parent=1 // pred_check_branch
      %14 = sbr.rel (0) target = $region13
    $region12: #{fnnsplit6_forward.1} parent=1 // pred_region
      _
    $region13: #{fnnsplit6_forward.1} parent=1 // pred_fallthru
      _
    %v15 = vld [vmem:[%s0] sm:$0xff]
    %v16 = vld [vmem:[%s1] sm:$0xff]
    %v17 = vld [vmem:[%s1 + $0x8] sm:$0xff]
    %v18 = vld [vmem:[%s1 + $0x10] sm:$0xff]
    %v19 = vld [vmem:[%s1 + $0x18] sm:$0xff]
    %v20 = vld [vmem:[%s1 + $0x20] sm:$0xff]
    %v21 = vld [vmem:[%s1 + $0x28] sm:$0xff]
    %v22 = vld [vmem:[%s1 + $0x30] sm:$0x3]
    %v23 = vld [vmem:[%s2] sm:$0x1]
    %v25 = vperm.slane %v23, 0
    %vm27 = vcmask 408576
    %v29 = vsel %vm27, %v15, 0
    %vm31 = vcmask 1041408
    %v33 = vsel %vm31, %v22, 0
    %35 = vmatpush.msra.mxu0 0.0
    %36 = vmatpush.msra.mxu0 0.0
    %37 = vmatpush.msra.mxu0 0.0
    %38 = vmatpush.msra.mxu0 0.0
    %39 = vmatpush.msra.mxu0 0.0
    %40 = vmatpush.msra.mxu0 0.0
    %41 = vmatpush.msra.mxu0 0.0
    %42 = vmatpush.msra.mxu0 0.0
    %43 = vmatpush.msra.mxu0 0.0
    %44 = vmatpush.msra.mxu0 %v33
    %45 = vmatpush.msra.mxu0 %v21
    %46 = vmatpush.msra.mxu0 %v20
    %47 = vmatpush.msra.mxu0 %v19
    %48 = vmatpush.msra.mxu0 %v18
    %49 = vmatpush.msra.mxu0 %v17
    %50 = vmatpush.msra.mxu0 %v16
    %51 = vmatmul.f32.gmra.mxu0 %v29
    %v52 = vpop.f32.mrf.mxu0
    %v53 = vadd.f32 %v25, %v52
    %54 = vdwg.mxu0
    %vm55 = vcmask 39936
    %56 = vst.msk [vmem:[#allocation2] sm:$0xff] %vm55, %v53
    // Predicated region
    $region14: #{fnnsplit6_forward.1} parent=1 // pred_check
      _
    $region15: #{fnnsplit6_forward.1} parent=1 // pred_check_branch
      %58 = sbr.rel (0) target = $region17
    $region16: #{fnnsplit6_forward.1} parent=1 // pred_region
      %60 = vsyncadd [#allocation3], 0
      %s62 = sshll.u32 [#allocation2], 4
      %s63 = int_to_ptr.vmem [resolvable:$true] %s62
      %s64 = sshll.u32 %s3, 4
      %s65 = int_to_ptr.hbm [resolvable:$true] %s64
      %67 = dma.vmem_to_hbm [thread:$0]  %s63, 128, %s65, [#allocation3]
    $region17: #{fnnsplit6_forward.1} parent=1 // pred_fallthru
      _
    // Predicated region
    $region18: #{fnnsplit6_forward.1} parent=1 // pred_check
      _
    $region19: #{fnnsplit6_forward.1} parent=1 // pred_check_branch
      %69 = sbr.rel (0) target = $region21
    $region20: #{fnnsplit6_forward.1} parent=1 // pred_region
      %71 = dma.done [#allocation3], 128
    $region21: #{fnnsplit6_forward.1} parent=1 // pred_fallthru
      _
    %72 = vsyncpa [#allocation3], 1

</llo_original>
